<compile_context>
chip_gen: v6e
topology: v6e:2x2x1
jax: 0.10.0
libtpu: 0.0.40
codegen_flags: <defaults>
</compile_context>

<pallas_src>
import jax
import jax.numpy as jnp
from jax.experimental import pallas as pl
from jax.experimental.pallas import tpu as pltpu


def _round_up(x, m):
    return ((x + m - 1) // m) * m


def _softplus(x):
    # Branch-free numerically-stable softplus; matches
    # torch.nn.Softplus(beta=1, threshold=20) to well below f32 epsilon.
    return jnp.maximum(x, 0.0) + jnp.log1p(jnp.exp(-jnp.abs(x)))


def _context_fusion_kernel(x_ref, w1_ref, b1_ref, w2_ref, b2_ref, out_ref):
    # x_ref:  (TM, Din) f32   concat(motion, scene) tile
    # w1_ref: (Din, Ep) bf16, b1_ref: (1, Ep) f32
    # w2_ref: (Ep, Ep)  bf16 (rows >= E zeroed so padded-h garbage cannot leak)
    # b2_ref: (1, Ep)   f32
    # out_ref:(TM, Ep)  f32   lane-dense; columns >= E are sliced off downstream
    x = x_ref[...].astype(jnp.bfloat16)
    h = jnp.dot(x, w1_ref[...], preferred_element_type=jnp.float32) + b1_ref[...]
    h = _softplus(h)
    # Softplus kept in f32: v5e's EUP has no bf16 path. (On v7x a bf16 softplus
    # would halve EUP time if EUP ever becomes the binding slot.)
    y = (jnp.dot(h.astype(jnp.bfloat16), w2_ref[...],
                 preferred_element_type=jnp.float32) + b2_ref[...])
    out_ref[...] = _softplus(y).astype(out_ref.dtype)


def _pick_tile_m(n_rows, max_tile=2048):
    # <= 256 rows: single grid step (work is negligible anyway).
    if n_rows <= 256:
        return _round_up(max(n_rows, 8), 8)
    # Otherwise choose an EVEN number of grid steps (>= 2) so v7x's two
    # TensorCores stay balanced, with each step capped at max_tile rows.
    # Per-step VMEM at 2048 rows is ~2.6 MiB double-buffered input +
    # ~2 MiB output — far under every chip's scoped VMEM limit — while
    # amortizing the ~0.35us per-step overhead on single-TC v5e/v6e.
    steps = 2 * pl.cdiv(n_rows, 2 * max_tile)
    return _round_up(pl.cdiv(n_rows, steps), 8)


def context_fusion_mlp(x2d, w1_p, b1_p, w2_p, b2_p, *, tile_m=None):
    """x2d: (N, Din) f32 concat -> padded (N, Ep) f32 result.

    Only the first `encoding_size` columns are meaningful; the padded columns
    hold softplus(0)=log(2).  The slice to (N, E) is intentionally NOT done
    here — keep the lane-dense padded layout and slice at the consumer so XLA
    can fuse it (avoids a separate HBM round-trip copy).
    """
    N, d_in = x2d.shape
    e_pad = w1_p.shape[1]
    if tile_m is None:
        tile_m = _pick_tile_m(N)

    grid = (pl.cdiv(N, tile_m),)
    return pl.pallas_call(
        _context_fusion_kernel,
        out_shape=jax.ShapeDtypeStruct((N, e_pad), jnp.float32),
        grid_spec=pltpu.PrefetchScalarGridSpec(
            num_scalar_prefetch=0,
            grid=grid,
            in_specs=[
                pl.BlockSpec((tile_m, d_in), lambda i: (i, 0)),     # concat tile
                pl.BlockSpec((d_in, e_pad), lambda i: (0, 0)),      # w1 (bf16)
                pl.BlockSpec((1, e_pad), lambda i: (0, 0)),         # b1
                pl.BlockSpec((e_pad, e_pad), lambda i: (0, 0)),     # w2 (bf16)
                pl.BlockSpec((1, e_pad), lambda i: (0, 0)),         # b2
            ],
            out_specs=pl.BlockSpec((tile_m, e_pad), lambda i: (i, 0)),
        ),
        compiler_params=pltpu.CompilerParams(
            dimension_semantics=("parallel",),
        ),
    )(x2d, w1_p, b1_p, w2_p, b2_p)


class ContextFusion:
    """JAX/Pallas reimplementation of the R2P2 ContextFusion module."""

    def __init__(self, encoding_size=50, hidden_size=150, scene_size=100,
                 scene_channels=6, key=None):
        self.encoding_size = encoding_size
        self.hidden_size = hidden_size
        self.scene_channels = scene_channels
        if key is None:
            key = jax.random.PRNGKey(42)
        k1, k2, k3, k4 = jax.random.split(key, 4)

        din = hidden_size + scene_channels
        e = encoding_size
        bound1 = 1.0 / (din ** 0.5)
        bound2 = 1.0 / (e ** 0.5)

        # Canonical (unpadded) f32 parameters, stored transposed: (in, out).
        self.w1 = jax.random.uniform(k1, (din, e), jnp.float32, -bound1, bound1)
        self.b1 = jax.random.uniform(k2, (1, e), jnp.float32, -bound1, bound1)
        self.w2 = jax.random.uniform(k3, (e, e), jnp.float32, -bound2, bound2)
        self.b2 = jax.random.uniform(k4, (1, e), jnp.float32, -bound2, bound2)

        # Kernel-side parameters: lane-pad E -> Ep (multiple of 128) and cast
        # the weights to bf16 (MXU-native).  w2's padded ROWS are zero so the
        # softplus(0)=log(2) values in padded h columns contribute exactly 0
        # to the real outputs.  Biases stay f32 (added post-accumulation).
        e_pad = _round_up(e, 128)
        self.e_pad = e_pad
        self.w1_p = (jnp.zeros((din, e_pad), jnp.bfloat16)
                     .at[:, :e].set(self.w1.astype(jnp.bfloat16)))
        self.b1_p = jnp.zeros((1, e_pad), jnp.float32).at[:, :e].set(self.b1)
        self.w2_p = (jnp.zeros((e_pad, e_pad), jnp.bfloat16)
                     .at[:e, :e].set(self.w2.astype(jnp.bfloat16)))
        self.b2_p = jnp.zeros((1, e_pad), jnp.float32).at[:, :e].set(self.b2)

    def __call__(self, motion_encoding, scene):
        # motion_encoding: (Na, Td, hidden_size), scene: (Na, Td, scene_channels)
        hidden = [motion_encoding]
        # The concat is part of the module contract (hidden[1]) so it is
        # materialized anyway; the kernel consumes it directly (single K-pass).
        concat_encoding = jnp.concatenate((motion_encoding, scene), axis=-1)
        hidden.append(concat_encoding)

        lead_shape = motion_encoding.shape[:-1]
        x2d = concat_encoding.reshape(-1, self.hidden_size + self.scene_channels)

        out_padded = context_fusion_mlp(x2d, self.w1_p, self.b1_p,
                                        self.w2_p, self.b2_p)
        # Lazy slice of the padded lane-dense result; under jit this fuses
        # into the consumer instead of forcing an extra HBM round trip.
        final_output = (out_padded
                        .reshape(*lead_shape, self.e_pad)[..., :self.encoding_size])
        hidden.append(final_output)
        return final_output, hidden


def _reference_forward_f32(module, motion_encoding, scene):
    """Pure-JAX f32 reference (module semantics)."""
    concat = jnp.concatenate((motion_encoding, scene), axis=-1)
    h = _softplus(concat @ module.w1 + module.b1)
    return _softplus(h @ module.w2 + module.b2)


def _reference_forward_bf16(module, motion_encoding, scene):
    """Reference with the same bf16-operand / f32-accumulate rounding as the kernel."""
    x = jnp.concatenate((motion_encoding, scene), axis=-1).astype(jnp.bfloat16)
    h = _softplus(jnp.dot(x, module.w1_p, preferred_element_type=jnp.float32)
                  + module.b1_p)
    y = (jnp.dot(h.astype(jnp.bfloat16), module.w2_p,
                 preferred_element_type=jnp.float32) + module.b2_p)
    return _softplus(y)[..., :module.encoding_size]


if __name__ == "__main__":
    Na, Td = 2, 8
    hidden_size, scene_channels, encoding_size = 150, 6, 50

    key = jax.random.PRNGKey(0)
    k_m, k_s, k_p = jax.random.split(key, 3)
    motion_encoding = jax.random.normal(k_m, (Na, Td, hidden_size), jnp.float32)
    scene = jax.random.normal(k_s, (Na, Td, scene_channels), jnp.float32)

    module = ContextFusion(encoding_size=encoding_size, hidden_size=hidden_size,
                           scene_channels=scene_channels, key=k_p)

    final_output, hidden = module(motion_encoding, scene)
    final_output = jax.block_until_ready(final_output)

    assert final_output.shape == (Na, Td, encoding_size)
    assert hidden[0].shape == (Na, Td, hidden_size)
    assert hidden[1].shape == (Na, Td, hidden_size + scene_channels)
    assert hidden[2].shape == (Na, Td, encoding_size)

    # Loose check vs f32 reference (bf16 matmul operands), tight check vs a
    # reference that applies identical bf16 rounding.
    ref_f32 = _reference_forward_f32(module, motion_encoding, scene)
    assert jnp.allclose(final_output, ref_f32, atol=3e-2, rtol=3e-2)
    ref_b16 = _reference_forward_bf16(module, motion_encoding, scene)
    assert jnp.allclose(final_output, ref_b16, atol=1e-4, rtol=1e-4)

    # Medium-N path: even grid-step branch + ragged last block (N=3000 -> 2
    # steps of 1504 rows, last block ragged).
    N2 = 3000
    x2 = jax.random.normal(jax.random.PRNGKey(7),
                           (N2, hidden_size + scene_channels), jnp.float32)
    out2 = context_fusion_mlp(x2, module.w1_p, module.b1_p,
                              module.w2_p, module.b2_p)
    out2 = jax.block_until_ready(out2)[:, :encoding_size]
    ref2 = _softplus(_softplus(x2 @ module.w1 + module.b1) @ module.w2 + module.b2)
    assert jnp.allclose(out2, ref2, atol=3e-2, rtol=3e-2)

    # Tiny forced tile: many grid steps with a ragged final block (N=21, tm=8).
    x3 = jax.random.normal(jax.random.PRNGKey(8),
                           (21, hidden_size + scene_channels), jnp.float32)
    out3 = context_fusion_mlp(x3, module.w1_p, module.b1_p,
                              module.w2_p, module.b2_p, tile_m=8)
    out3 = jax.block_until_ready(out3)[:, :encoding_size]
    ref3 = _softplus(_softplus(x3 @ module.w1 + module.b1) @ module.w2 + module.b2)
    assert jnp.allclose(out3, ref3, atol=3e-2, rtol=3e-2)

    print("KERNEL_OK")
</pallas_src>

<mosaic_0001>
module attributes {stable_mosaic.version = 11 : i64} {
  func.func @_context_fusion_kernel(%arg0: i32, %arg1: memref<16x156xf32, #tpu.memory_space<vmem>>, %arg2: memref<156x128xbf16, #tpu.memory_space<vmem>>, %arg3: memref<1x128xf32, #tpu.memory_space<vmem>>, %arg4: memref<128x128xbf16, #tpu.memory_space<vmem>>, %arg5: memref<1x128xf32, #tpu.memory_space<vmem>>, %arg6: memref<16x128xf32, #tpu.memory_space<vmem>>) attributes {dimension_semantics = [#tpu.dimension_semantics<parallel>], iteration_bounds = array<i64: 1>, scalar_prefetch = 0 : i64, scratch_operands = 0 : i64, tpu.core_type = #tpu.core_type<tc>, window_params = [{transform_indices = @transform_0, window_bounds = array<i64: 16, 156>}, {pipeline_mode = #tpu.pipeline_mode<synchronous>, transform_indices = @transform_1, window_bounds = array<i64: 156, 128>}, {pipeline_mode = #tpu.pipeline_mode<synchronous>, transform_indices = @transform_2, window_bounds = array<i64: 1, 128>}, {pipeline_mode = #tpu.pipeline_mode<synchronous>, transform_indices = @transform_3, window_bounds = array<i64: 128, 128>}, {pipeline_mode = #tpu.pipeline_mode<synchronous>, transform_indices = @transform_4, window_bounds = array<i64: 1, 128>}, {transform_indices = @transform_5, window_bounds = array<i64: 16, 128>}]} {
    %c0 = arith.constant 0 : index
    %c0_0 = arith.constant 0 : index
    %0 = vector.load %arg1[%c0, %c0_0] : memref<16x156xf32, #tpu.memory_space<vmem>>, vector<16x156xf32>
    %1 = arith.truncf %0 : vector<16x156xf32> to vector<16x156xbf16>
    %c0_1 = arith.constant 0 : index
    %c0_2 = arith.constant 0 : index
    %2 = vector.load %arg2[%c0_1, %c0_2] : memref<156x128xbf16, #tpu.memory_space<vmem>>, vector<156x128xbf16>
    %cst = arith.constant dense<0.000000e+00> : vector<16x128xf32>
    %3 = tpu.matmul %1, %2, %cst {dimension_numbers = #tpu.dot_dimension_numbers<[1], [0], [0], [1], [0, 0, 1, 1], [], []>} : vector<16x156xbf16>, vector<156x128xbf16>, vector<16x128xf32> -> vector<16x128xf32>
    %c0_3 = arith.constant 0 : index
    %c0_4 = arith.constant 0 : index
    %4 = vector.load %arg3[%c0_3, %c0_4] : memref<1x128xf32, #tpu.memory_space<vmem>>, vector<1x128xf32>
    %5 = vector.broadcast %4 : vector<1x128xf32> to vector<16x128xf32>
    %6 = arith.addf %3, %5 : vector<16x128xf32>
    %cst_5 = arith.constant 0.000000e+00 : f32
    %7 = vector.broadcast %cst_5 : f32 to vector<16x128xf32>
    %8 = arith.maximumf %6, %7 : vector<16x128xf32>
    %9 = math.absf %6 : vector<16x128xf32>
    %cst_6 = arith.constant 0.000000e+00 : f32
    %10 = vector.broadcast %cst_6 : f32 to vector<16x128xf32>
    %11 = arith.subf %10, %9 : vector<16x128xf32>
    %12 = math.exp %11 : vector<16x128xf32>
    %13 = math.log1p %12 : vector<16x128xf32>
    %14 = arith.addf %8, %13 : vector<16x128xf32>
    %15 = arith.truncf %14 : vector<16x128xf32> to vector<16x128xbf16>
    %c0_7 = arith.constant 0 : index
    %c0_8 = arith.constant 0 : index
    %16 = vector.load %arg4[%c0_7, %c0_8] : memref<128x128xbf16, #tpu.memory_space<vmem>>, vector<128x128xbf16>
    %cst_9 = arith.constant dense<0.000000e+00> : vector<16x128xf32>
    %17 = tpu.matmul %15, %16, %cst_9 {dimension_numbers = #tpu.dot_dimension_numbers<[1], [0], [0], [1], [0, 0, 1, 1], [], []>} : vector<16x128xbf16>, vector<128x128xbf16>, vector<16x128xf32> -> vector<16x128xf32>
    %c0_10 = arith.constant 0 : index
    %c0_11 = arith.constant 0 : index
    %18 = vector.load %arg5[%c0_10, %c0_11] : memref<1x128xf32, #tpu.memory_space<vmem>>, vector<1x128xf32>
    %19 = vector.broadcast %18 : vector<1x128xf32> to vector<16x128xf32>
    %20 = arith.addf %17, %19 : vector<16x128xf32>
    %cst_12 = arith.constant 0.000000e+00 : f32
    %21 = vector.broadcast %cst_12 : f32 to vector<16x128xf32>
    %22 = arith.maximumf %20, %21 : vector<16x128xf32>
    %23 = math.absf %20 : vector<16x128xf32>
    %cst_13 = arith.constant 0.000000e+00 : f32
    %24 = vector.broadcast %cst_13 : f32 to vector<16x128xf32>
    %25 = arith.subf %24, %23 : vector<16x128xf32>
    %26 = math.exp %25 : vector<16x128xf32>
    %27 = math.log1p %26 : vector<16x128xf32>
    %28 = arith.addf %22, %27 : vector<16x128xf32>
    %c0_14 = arith.constant 0 : index
    %c0_15 = arith.constant 0 : index
    %29 = vector.load %arg6[%c0_14, %c0_15] : memref<16x128xf32, #tpu.memory_space<vmem>>, vector<16x128xf32>
    tpu.vector_store %arg6[%c0_14, %c0_15], %28 {strides = array<i32>} : memref<16x128xf32, #tpu.memory_space<vmem>>, vector<16x128xf32>,
    return
  }
  func.func @transform_0(%arg0: i32) -> (i32, i32) {
    %c0_i32 = arith.constant 0 : i32
    %c0_i32_0 = arith.constant 0 : i32
    return %arg0, %c0_i32 : i32, i32
  }
  func.func @transform_1(%arg0: i32) -> (i32, i32) {
    %c0_i32 = arith.constant 0 : i32
    %c0_i32_0 = arith.constant 0 : i32
    %c0_i32_1 = arith.constant 0 : i32
    return %c0_i32, %c0_i32_0 : i32, i32
  }
  func.func @transform_2(%arg0: i32) -> (i32, i32) {
    %c0_i32 = arith.constant 0 : i32
    %c0_i32_0 = arith.constant 0 : i32
    %c0_i32_1 = arith.constant 0 : i32
    return %c0_i32, %c0_i32_0 : i32, i32
  }
  func.func @transform_3(%arg0: i32) -> (i32, i32) {
    %c0_i32 = arith.constant 0 : i32
    %c0_i32_0 = arith.constant 0 : i32
    %c0_i32_1 = arith.constant 0 : i32
    return %c0_i32, %c0_i32_0 : i32, i32
  }
  func.func @transform_4(%arg0: i32) -> (i32, i32) {
    %c0_i32 = arith.constant 0 : i32
    %c0_i32_0 = arith.constant 0 : i32
    %c0_i32_1 = arith.constant 0 : i32
    return %c0_i32, %c0_i32_0 : i32, i32
  }
  func.func @transform_5(%arg0: i32) -> (i32, i32) {
    %c0_i32 = arith.constant 0 : i32
    %c0_i32_0 = arith.constant 0 : i32
    return %arg0, %c0_i32 : i32, i32
  }
}

</mosaic_0001>

<llo_original>
// kernel: tpu_custom_call.1
$region0: #{tpu_custom_call.1}
  #allocation0 [shape = 'u32[]', space=smem, size = 0x4, offset = 0x4, fixed_abs, tag = 'smem constant byte address 0x4 - core index']
  #allocation1 [shape = 'u32[144,128]{1,0:T(1,128)}', space=vmem, size = 0x12000, scoped, tag = 'internal scratch']
  %s0 = inlined_call_operand.hbm [shape: f32[16,156], index: 0, kind: input, shape index: {}]
  %s1 = inlined_call_operand.hbm [shape: bf16[156,128], index: 1, kind: input, shape index: {}]
  %s2 = inlined_call_operand.vmem [shape: f32[1,128], index: 2, kind: input, shape index: {}]
  %s3 = inlined_call_operand.hbm [shape: bf16[128,128], index: 3, kind: input, shape index: {}]
  %s4 = inlined_call_operand.vmem [shape: f32[1,128], index: 4, kind: input, shape index: {}]
  %s5 = inlined_call_operand.hbm [shape: f32[16,128], index: 5, kind: output, shape index: {}]
  %s6 = sld [smem:[#allocation0]]
  $region42: #{tpu_custom_call.1} parent=0
    _
  %s8 = ssub.s32 1, %s6
  %s9 = scalar_select 0, %s8, %s6
  $region1: #{tpu_custom_call.1} parent=0
    #allocation2 [shape = 'u8[16384]{0}', space=vmem, size = 0x4000, scoped, tag = 'input window, operand 0, single buffered']
    #allocation3 [shape = 's32[1]{0}', space=sflag, size = 0x4, scoped, tag = 'scoped memory for tpu_custom_call.1']
    #allocation4 [shape = 's32[1]{0}', space=sflag, size = 0x4, scoped, tag = 'scoped memory for tpu_custom_call.1']
    #allocation5 [shape = 'u8[40960]{0}', space=vmem, size = 0xa000, scoped, tag = 'input window, operand 1, single buffered']
    #allocation6 [shape = 's32[1]{0}', space=sflag, size = 0x4, scoped, tag = 'scoped memory for tpu_custom_call.1']
    #allocation7 [shape = 'u8[32768]{0}', space=vmem, size = 0x8000, scoped, tag = 'input window, operand 3, single buffered']
    #allocation8 [shape = 'u8[8192]{0}', space=vmem, size = 0x2000, scoped, tag = 'output window, operand 0, single buffered']
    %10 = vsyncpa [#allocation3], 0
    %11 = vsyncpa [#allocation6], 0
    %12 = vsyncpa [#allocation4], 0
    // Predicated region
    $region2: #{tpu_custom_call.1} parent=1 // pred_check
      _
    $region3: #{tpu_custom_call.1} parent=1 // pred_check_branch
      %14 = sbr.rel (0) target = $region5
    $region4: #{tpu_custom_call.1} parent=1 // pred_region
      %s16 = ssub.s32 512, 512
      %17 = vsyncadd [#allocation3], %s16
      %s18 = sshll.u32 [#allocation2], 4
      %s19 = int_to_ptr.vmem [resolvable:$true] %s18
      %24 = dma.hbm_to_vmem [thread:$0]  %s0, 512, %s19, [#allocation3], 256, 256, 16
    $region5: #{tpu_custom_call.1} parent=1 // pred_fallthru
      _
    // Predicated region
    $region6: #{tpu_custom_call.1} parent=1 // pred_check
      _
    $region7: #{tpu_custom_call.1} parent=1 // pred_check_branch
      %26 = sbr.rel (0) target = $region9
    $region8: #{tpu_custom_call.1} parent=1 // pred_region
      %s28 = ssub.s32 1280, 1280
      %29 = vsyncadd [#allocation6], %s28
      %s30 = sshll.u32 [#allocation5], 4
      %s31 = int_to_ptr.vmem [resolvable:$true] %s30
      %36 = dma.hbm_to_vmem [thread:$0]  %s1, 1280, %s31, [#allocation6], 64, 64, 4
    $region9: #{tpu_custom_call.1} parent=1 // pred_fallthru
      _
    // Predicated region
    $region10: #{tpu_custom_call.1} parent=1 // pred_check
      _
    $region11: #{tpu_custom_call.1} parent=1 // pred_check_branch
      %38 = sbr.rel (0) target = $region13
    $region12: #{tpu_custom_call.1} parent=1 // pred_region
      _
    $region13: #{tpu_custom_call.1} parent=1 // pred_fallthru
      _
    // Predicated region
    $region14: #{tpu_custom_call.1} parent=1 // pred_check
      _
    $region15: #{tpu_custom_call.1} parent=1 // pred_check_branch
      %40 = sbr.rel (0) target = $region17
    $region16: #{tpu_custom_call.1} parent=1 // pred_region
      %s42 = ssub.s32 1024, 1024
      %43 = vsyncadd [#allocation6], %s42
      %s44 = sshll.u32 [#allocation7], 4
      %s45 = int_to_ptr.vmem [resolvable:$true] %s44
      %50 = dma.hbm_to_vmem [thread:$0]  %s3, 1024, %s45, [#allocation6], 64, 64, 4
    $region17: #{tpu_custom_call.1} parent=1 // pred_fallthru
      _
    // Predicated region
    $region18: #{tpu_custom_call.1} parent=1 // pred_check
      _
    $region19: #{tpu_custom_call.1} parent=1 // pred_check_branch
      %52 = sbr.rel (0) target = $region21
    $region20: #{tpu_custom_call.1} parent=1 // pred_region
      _
    $region21: #{tpu_custom_call.1} parent=1 // pred_fallthru
      _
    // Predicated region
    $region22: #{tpu_custom_call.1} parent=1 // pred_check
      _
    $region23: #{tpu_custom_call.1} parent=1 // pred_check_branch
      %54 = sbr.rel (0) target = $region25
    $region24: #{tpu_custom_call.1} parent=1 // pred_region
      %55 = dma.done [#allocation3], 512
    $region25: #{tpu_custom_call.1} parent=1 // pred_fallthru
      _
    // Predicated region
    $region26: #{tpu_custom_call.1} parent=1 // pred_check
      _
    $region27: #{tpu_custom_call.1} parent=1 // pred_check_branch
      %57 = sbr.rel (0) target = $region29
    $region28: #{tpu_custom_call.1} parent=1 // pred_region
      %58 = dma.done [#allocation6], 1280
    $region29: #{tpu_custom_call.1} parent=1 // pred_fallthru
      _
    // Predicated region
    $region30: #{tpu_custom_call.1} parent=1 // pred_check
      _
    $region31: #{tpu_custom_call.1} parent=1 // pred_check_branch
      %60 = sbr.rel (0) target = $region33
    $region32: #{tpu_custom_call.1} parent=1 // pred_region
      %61 = dma.done [#allocation6], 1024
    $region33: #{tpu_custom_call.1} parent=1 // pred_fallthru
      _
    %v63 = vld [vmem:[#allocation2] sm:$0xff]
    %v64 = vld [vmem:[#allocation2 + $0x8] sm:$0xff]
    %v65 = vld [vmem:[#allocation2 + $0x10] sm:$0xff]
    %v66 = vld [vmem:[#allocation2 + $0x18] sm:$0xff]
    %v67 = vpack.c.bf16 %v65, %v63
    %v68 = vpack.c.bf16 %v66, %v64
    %v69 = vld [vmem:[#allocation5] sm:$0xf]
    %v70 = vld [vmem:[#allocation5 + $0x4] sm:$0xf]
    %v71 = vld [vmem:[#allocation5 + $0x8] sm:$0xf]
    %v72 = vld [vmem:[#allocation5 + $0xc] sm:$0xf]
    %v73 = vld [vmem:[#allocation5 + $0x10] sm:$0xf]
    %v74 = vld [vmem:[#allocation5 + $0x14] sm:$0xf]
    %v75 = vld [vmem:[#allocation5 + $0x18] sm:$0xf]
    %v76 = vld [vmem:[#allocation5 + $0x1c] sm:$0xf]
    %v77 = vld [vmem:[#allocation5 + $0x20] sm:$0xf]
    %v78 = vld [vmem:[#allocation5 + $0x24] sm:$0xf]
    %v79 = vld [vmem:[#allocation5 + $0x28] sm:$0xf]
    %v80 = vld [vmem:[#allocation5 + $0x2c] sm:$0xf]
    %v81 = vld [vmem:[#allocation5 + $0x30] sm:$0xf]
    %v82 = vld [vmem:[#allocation5 + $0x34] sm:$0xf]
    %v83 = vld [vmem:[#allocation5 + $0x38] sm:$0xf]
    %v84 = vld [vmem:[#allocation5 + $0x3c] sm:$0xf]
    %v85 = vld [vmem:[#allocation5 + $0x40] sm:$0xf]
    %v86 = vld [vmem:[#allocation5 + $0x44] sm:$0xf]
    %v87 = vld [vmem:[#allocation5 + $0x48] sm:$0xf]
    %v88 = vld [vmem:[#allocation5 + $0x4c] sm:$0x3]
    %v89 = vld [vmem:[%s2] sm:$0x1]
    %v91 = vlaneseq
    %v92 = vshrl.u32 %v91, 7
    %v93 = vsub.s32 0, %v92
    %v94 = vrot.slane %v89, %v93
    %v116 = vunpack.c.l.b16 %v69
    %v117 = vunpack.c.l.b16 %v70
    %v118 = vunpack.c.l.b16 %v71
    %v119 = vunpack.c.l.b16 %v72
    %v120 = vunpack.c.l.b16 %v73
    %v121 = vunpack.c.l.b16 %v74
    %v122 = vunpack.c.l.b16 %v75
    %v123 = vunpack.c.l.b16 %v76
    %v124 = vunpack.c.l.b16 %v77
    %v125 = vunpack.c.l.b16 %v78
    %v126 = vunpack.c.l.b16 %v79
    %v127 = vunpack.c.l.b16 %v80
    %v128 = vunpack.c.l.b16 %v81
    %v129 = vunpack.c.l.b16 %v82
    %v130 = vunpack.c.l.b16 %v83
    %v131 = vunpack.c.l.b16 %v84
    %v132 = vunpack.c.l.b16 %v85
    %v133 = vunpack.c.l.b16 %v86
    %v134 = vunpack.c.l.b16 %v87
    %v135 = vunpack.c.l.b16 %v88
    %v136 = vpack.c.b16 %v117, %v116
    %v137 = vpack.c.b16 %v119, %v118
    %v138 = vpack.c.b16 %v121, %v120
    %v139 = vpack.c.b16 %v123, %v122
    %v140 = vpack.c.b16 %v125, %v124
    %v141 = vpack.c.b16 %v127, %v126
    %v142 = vpack.c.b16 %v129, %v128
    %v143 = vpack.c.b16 %v131, %v130
    %v144 = vpack.c.b16 %v133, %v132
    %v145 = vpack.c.b16 %v135, %v134
    %vm155 = vcmask 228352
    %v157 = vsel %vm155, %v68, 0
    %vm159 = vcmask 1045504
    %v161 = vsel %vm159, %v145, 0
    %163 = vmatprep.subr.bf16.mxu0 0
    %164 = vmatpush1.bf16.msra.mxu0 %v143
    %165 = vmatprep.subr.bf16.mxu0 0
    %166 = vmatpush1.bf16.msra.mxu0 %v142
    %167 = vmatprep.subr.bf16.mxu0 0
    %168 = vmatpush1.bf16.msra.mxu0 %v141
    %169 = vmatprep.subr.bf16.mxu0 0
    %170 = vmatpush1.bf16.msra.mxu0 %v140
    %171 = vmatprep.subr.bf16.mxu0 0
    %172 = vmatpush1.bf16.msra.mxu0 %v139
    %173 = vmatprep.subr.bf16.mxu0 0
    %174 = vmatpush1.bf16.msra.mxu0 %v138
    %175 = vmatprep.subr.bf16.mxu0 0
    %176 = vmatpush1.bf16.msra.mxu0 %v137
    %177 = vmatprep.subr.bf16.mxu0 0
    %178 = vmatpush1.bf16.msra.mxu0 %v136
    %179 = vmatprep.subr.bf16.mxu0 0
    %180 = vmatpush2.bf16.msra.mxu0 0
    %181 = vmatprep.subr.bf16.mxu0 0
    %182 = vmatpush2.bf16.msra.mxu0 0
    %183 = vmatprep.subr.bf16.mxu0 0
    %184 = vmatpush2.bf16.msra.mxu0 0
    %185 = vmatprep.subr.bf16.mxu0 0
    %186 = vmatpush2.bf16.msra.mxu0 0
    %187 = vmatprep.subr.bf16.mxu0 0
    %188 = vmatpush2.bf16.msra.mxu0 0
    %189 = vmatprep.subr.bf16.mxu0 0
    %190 = vmatpush2.bf16.msra.mxu0 0
    %191 = vmatprep.subr.bf16.mxu0 0
    %192 = vmatpush2.bf16.msra.mxu0 %v161
    %193 = vmatprep.subr.bf16.mxu0 0
    %194 = vmatpush2.bf16.msra.mxu0 %v144
    %195 = vmatprep.mubr.bf16.mxu0 %v157
    %196 = vmatmul.mubr.bf16.gmra.mxu0 %v67
    %v197 = vpop.f32.mrf.mxu0
    %v198 = vadd.f32 %v94, %v197
    %v199 = vpop.f32.mrf.mxu0
    %v200 = vpop.f32.mrf.mxu0
    %v201 = vadd.f32 %v94, %v200
    %v202 = vpop.f32.mrf.mxu0
    %203 = vdwg.mxu0
    %v204 = vmax.f32 %v198, 0.0
    %v205 = vmax.f32 %v201, 0.0
    %v206 = vand.u32 2147483647, %v198
    %v207 = vand.u32 2147483647, %v201
    %v208 = vsub.f32 0.0, %v206
    %v209 = vsub.f32 0.0, %v207
    %v210 = vmul.f32 %v208, 1.442695
    %v211 = vpow.pop %v210
    %v212 = vmul.f32 %v209, 1.442695
    %v213 = vpow.pop %v212
    %v214 = vadd.f32 %v211, 1.0
    %v215 = vlog2.pop %v214
    %v216 = vmul.f32 %v215, 0.6931472
    %v217 = vmul.f32 -0.5, %v211
    %v218 = vadd.f32 %v217, 1.0
    %v219 = vmul.f32 %v218, %v211
    %v220 = vand.u32 2147483647, %v211
    %vm221 = vcmp.lt.f32.partialorder %v220, 0.0004427343
    %v222 = vsel %vm221, %v219, %v216
    %v223 = vadd.f32 %v213, 1.0
    %v224 = vlog2.pop %v223
    %v225 = vmul.f32 %v224, 0.6931472
    %v226 = vmul.f32 -0.5, %v213
    %v227 = vadd.f32 %v226, 1.0
    %v228 = vmul.f32 %v227, %v213
    %v229 = vand.u32 2147483647, %v213
    %vm230 = vcmp.lt.f32.partialorder %v229, 0.0004427343
    %v231 = vsel %vm230, %v228, %v225
    %v232 = vadd.f32 %v204, %v222
    %v233 = vadd.f32 %v205, %v231
    %v234 = vpack.c.bf16 %v233, %v232
    %v235 = vld [vmem:[#allocation7] sm:$0xf]
    %v236 = vld [vmem:[#allocation7 + $0x4] sm:$0xf]
    %v237 = vld [vmem:[#allocation7 + $0x8] sm:$0xf]
    %v238 = vld [vmem:[#allocation7 + $0xc] sm:$0xf]
    %v239 = vld [vmem:[#allocation7 + $0x10] sm:$0xf]
    %v240 = vld [vmem:[#allocation7 + $0x14] sm:$0xf]
    %v241 = vld [vmem:[#allocation7 + $0x18] sm:$0xf]
    %v242 = vld [vmem:[#allocation7 + $0x1c] sm:$0xf]
    %v243 = vld [vmem:[#allocation7 + $0x20] sm:$0xf]
    %v244 = vld [vmem:[#allocation7 + $0x24] sm:$0xf]
    %v245 = vld [vmem:[#allocation7 + $0x28] sm:$0xf]
    %v246 = vld [vmem:[#allocation7 + $0x2c] sm:$0xf]
    %v247 = vld [vmem:[#allocation7 + $0x30] sm:$0xf]
    %v248 = vld [vmem:[#allocation7 + $0x34] sm:$0xf]
    %v249 = vld [vmem:[#allocation7 + $0x38] sm:$0xf]
    %v250 = vld [vmem:[#allocation7 + $0x3c] sm:$0xf]
    %v251 = vld [vmem:[%s4] sm:$0x1]
    %v253 = vlaneseq
    %v254 = vshrl.u32 %v253, 7
    %v255 = vsub.s32 0, %v254
    %v256 = vrot.slane %v251, %v255
    %v274 = vunpack.c.l.b16 %v235
    %v275 = vunpack.c.l.b16 %v236
    %v276 = vunpack.c.l.b16 %v237
    %v277 = vunpack.c.l.b16 %v238
    %v278 = vunpack.c.l.b16 %v239
    %v279 = vunpack.c.l.b16 %v240
    %v280 = vunpack.c.l.b16 %v241
    %v281 = vunpack.c.l.b16 %v242
    %v282 = vunpack.c.l.b16 %v243
    %v283 = vunpack.c.l.b16 %v244
    %v284 = vunpack.c.l.b16 %v245
    %v285 = vunpack.c.l.b16 %v246
    %v286 = vunpack.c.l.b16 %v247
    %v287 = vunpack.c.l.b16 %v248
    %v288 = vunpack.c.l.b16 %v249
    %v289 = vunpack.c.l.b16 %v250
    %v290 = vpack.c.b16 %v275, %v274
    %v291 = vpack.c.b16 %v277, %v276
    %v292 = vpack.c.b16 %v279, %v278
    %v293 = vpack.c.b16 %v281, %v280
    %v294 = vpack.c.b16 %v283, %v282
    %v295 = vpack.c.b16 %v285, %v284
    %v296 = vpack.c.b16 %v287, %v286
    %v297 = vpack.c.b16 %v289, %v288
    %306 = vmatprep.subr.bf16.mxu0 0
    %307 = vmatpush1.bf16.msra.mxu0 %v297
    %308 = vmatprep.subr.bf16.mxu0 0
    %309 = vmatpush1.bf16.msra.mxu0 %v296
    %310 = vmatprep.subr.bf16.mxu0 0
    %311 = vmatpush1.bf16.msra.mxu0 %v295
    %312 = vmatprep.subr.bf16.mxu0 0
    %313 = vmatpush1.bf16.msra.mxu0 %v294
    %314 = vmatprep.subr.bf16.mxu0 0
    %315 = vmatpush1.bf16.msra.mxu0 %v293
    %316 = vmatprep.subr.bf16.mxu0 0
    %317 = vmatpush1.bf16.msra.mxu0 %v292
    %318 = vmatprep.subr.bf16.mxu0 0
    %319 = vmatpush1.bf16.msra.mxu0 %v291
    %320 = vmatprep.subr.bf16.mxu0 0
    %321 = vmatpush1.bf16.msra.mxu0 %v290
    %322 = vmatprep.subr.bf16.mxu0 0
    %323 = vmatpush2.bf16.msra.mxu0 0
    %324 = vmatprep.subr.bf16.mxu0 0
    %325 = vmatpush2.bf16.msra.mxu0 0
    %326 = vmatprep.subr.bf16.mxu0 0
    %327 = vmatpush2.bf16.msra.mxu0 0
    %328 = vmatprep.subr.bf16.mxu0 0
    %329 = vmatpush2.bf16.msra.mxu0 0
    %330 = vmatprep.subr.bf16.mxu0 0
    %331 = vmatpush2.bf16.msra.mxu0 0
    %332 = vmatprep.subr.bf16.mxu0 0
    %333 = vmatpush2.bf16.msra.mxu0 0
    %334 = vmatprep.subr.bf16.mxu0 0
    %335 = vmatpush2.bf16.msra.mxu0 0
    %336 = vmatprep.subr.bf16.mxu0 0
    %337 = vmatpush2.bf16.msra.mxu0 0
    %338 = vmatprep.mubr.bf16.mxu0 0
    %339 = vmatmul.mubr.bf16.gmra.mxu0 %v234
    %v340 = vpop.f32.mrf.mxu0
    %v341 = vadd.f32 %v256, %v340
    %v342 = vpop.f32.mrf.mxu0
    %v343 = vpop.f32.mrf.mxu0
    %v344 = vadd.f32 %v256, %v343
    %v345 = vpop.f32.mrf.mxu0
    %346 = vdwg.mxu0
    %v347 = vmax.f32 %v341, 0.0
    %v348 = vmax.f32 %v344, 0.0
    %v349 = vand.u32 2147483647, %v341
    %v350 = vand.u32 2147483647, %v344
    %v351 = vsub.f32 0.0, %v349
    %v352 = vsub.f32 0.0, %v350
    %v353 = vmul.f32 %v351, 1.442695
    %v354 = vpow.pop %v353
    %v355 = vmul.f32 %v352, 1.442695
    %v356 = vpow.pop %v355
    %v357 = vadd.f32 %v354, 1.0
    %v358 = vlog2.pop %v357
    %v359 = vmul.f32 %v358, 0.6931472
    %v360 = vmul.f32 -0.5, %v354
    %v361 = vadd.f32 %v360, 1.0
    %v362 = vmul.f32 %v361, %v354
    %v363 = vand.u32 2147483647, %v354
    %vm364 = vcmp.lt.f32.partialorder %v363, 0.0004427343
    %v365 = vsel %vm364, %v362, %v359
    %v366 = vadd.f32 %v356, 1.0
    %v367 = vlog2.pop %v366
    %v368 = vmul.f32 %v367, 0.6931472
    %v369 = vmul.f32 -0.5, %v356
    %v370 = vadd.f32 %v369, 1.0
    %v371 = vmul.f32 %v370, %v356
    %v372 = vand.u32 2147483647, %v356
    %vm373 = vcmp.lt.f32.partialorder %v372, 0.0004427343
    %v374 = vsel %vm373, %v371, %v368
    %v375 = vadd.f32 %v347, %v365
    %v376 = vadd.f32 %v348, %v374
    %377 = vst [vmem:[#allocation8] sm:$0xff] %v375
    %378 = vst [vmem:[#allocation8 + $0x8] sm:$0xff] %v376
    // Predicated region
    $region34: #{tpu_custom_call.1} parent=1 // pred_check
      _
    $region35: #{tpu_custom_call.1} parent=1 // pred_check_branch
      %380 = sbr.rel (0) target = $region37
    $region36: #{tpu_custom_call.1} parent=1 // pred_region
      %s382 = ssub.s32 256, 256
      %383 = vsyncadd [#allocation4], %s382
      %s384 = sshll.u32 [#allocation8], 4
      %s385 = int_to_ptr.vmem [resolvable:$true] %s384
      %390 = dma.vmem_to_hbm [thread:$0]  %s385, 256, %s5, [#allocation4], 128, 128, 8
    $region37: #{tpu_custom_call.1} parent=1 // pred_fallthru
      _
    // Predicated region
    $region38: #{tpu_custom_call.1} parent=1 // pred_check
      _
    $region39: #{tpu_custom_call.1} parent=1 // pred_check_branch
      %392 = sbr.rel (0) target = $region41
    $region40: #{tpu_custom_call.1} parent=1 // pred_region
      %393 = dma.done [#allocation4], 256
    $region41: #{tpu_custom_call.1} parent=1 // pred_fallthru
      _
    %394 = vsyncpa [#allocation3], 1
    %395 = vsyncpa [#allocation6], 1
    %396 = vsyncpa [#allocation4], 1

</llo_original>
